<compile_context>
chip_gen: v7x
topology: tpu7x:2x2x1
jax: 0.10.0
libtpu: 0.0.40
codegen_flags: <defaults>
</compile_context>

<pallas_src>
import functools

import jax
import jax.numpy as jnp
from jax.experimental import pallas as pl
from jax.experimental.pallas import tpu as pltpu

BN_EPS = 1e-5
LANE = 128


def _round_up(n, m=LANE):
    return ((n + m - 1) // m) * m


def _pad_axis(a, axis, target):
    pad = target - a.shape[axis]
    if pad <= 0:
        return a
    widths = [(0, 0)] * a.ndim
    widths[axis] = (0, pad)
    return jnp.pad(a, widths)


def _bn_relu(h, gamma, beta, inv_b):
    # Training-mode BatchNorm1d (biased variance) + ReLU, fused into one FMA.
    s1 = jnp.sum(h, axis=0, keepdims=True)
    s2 = jnp.sum(h * h, axis=0, keepdims=True)
    mean = s1 * inv_b
    var = s2 * inv_b - mean * mean          # E[h^2] - mean^2 (biased)
    scale = gamma * jax.lax.rsqrt(var + BN_EPS)
    shift = beta - mean * scale
    return jnp.maximum(h * scale + shift, 0.0)


def _mlp_decoder_kernel(*refs, n_hidden, segs, b4_seg, inv_b):
    # refs = (x, w_1..w_nhidden, w_last, packed_vec, out)
    x_ref = refs[0]
    w_refs = refs[1:1 + n_hidden]
    w_last_ref = refs[1 + n_hidden]
    vec_ref = refs[2 + n_hidden]
    o_ref = refs[3 + n_hidden]

    h = x_ref[...]
    for li in range(n_hidden):
        g_off, b_off, width = segs[li]
        # bf16 operands on the MXU, f32 accumulation; Linear bias omitted (BN cancels it).
        z = jnp.dot(h.astype(jnp.bfloat16), w_refs[li][...],
                    preferred_element_type=jnp.float32)
        gamma = vec_ref[:, g_off:g_off + width]
        beta = vec_ref[:, b_off:b_off + width]
        h = _bn_relu(z, gamma, beta, inv_b)
        # Dropout(p=0.0) is the identity.

    b4_off, b4_w = b4_seg
    z = jnp.dot(h.astype(jnp.bfloat16), w_last_ref[...],
                preferred_element_type=jnp.float32) + vec_ref[:, b4_off:b4_off + b4_w]
    # sigmoid(z) = 1 / (1 + exp(-z)); exp + approx reciprocal both run on the EUP.
    o_ref[...] = pl.reciprocal(1.0 + jnp.exp(-z), approx=True).astype(o_ref.dtype)


def mlp_decoder_forward(x, params, hidden_dims=None):
    """x: (B, in_dim) float32. params: PyTorch-layout flat list (see init_params)."""
    if hidden_dims is None:
        hidden_dims = [128, 256, 128]
    n_hidden = len(hidden_dims)
    B, in_dim = x.shape

    # Unpack (w, b, gamma, beta) * n_hidden + (w_last, b_last).
    ws, gammas, betas = [], [], []
    idx = 0
    for _ in range(n_hidden):
        w, _b_unused, g, be = params[idx:idx + 4]   # Linear bias cancelled by BN mean-subtract
        ws.append(w)
        gammas.append(g)
        betas.append(be)
        idx += 4
    w_last, b_last = params[idx], params[idx + 1]
    out_dim = w_last.shape[-1]

    # Lane-dense padding on FEATURE axes only (padding the batch would corrupt BN stats).
    in_pad = _round_up(in_dim)
    out_pad = _round_up(out_dim)
    x_p = _pad_axis(x, 1, in_pad).astype(jnp.float32)
    w_first = _pad_axis(ws[0], 0, in_pad)                  # pad K of first matmul
    w_last_p = _pad_axis(w_last, 1, out_pad)               # pad N of last matmul
    b_last_p = _pad_axis(b_last, 1, out_pad)

    # bf16 weights: MXU-native, halves weight DMA bytes. Accumulation stays f32.
    w_in = [w_first.astype(jnp.bfloat16)] \
         + [w.astype(jnp.bfloat16) for w in ws[1:]] \
         + [w_last_p.astype(jnp.bfloat16)]

    # Pack all (1, F) vectors into a single lane-dense f32 input (one DMA instead of 7+).
    pieces, segs, off = [], [], 0
    for li in range(n_hidden):
        width = hidden_dims[li]
        g_off = off
        pieces.append(gammas[li])
        off += width
        b_off = off
        pieces.append(betas[li])
        off += width
        segs.append((g_off, b_off, width))
    b4_seg = (off, out_pad)
    pieces.append(b_last_p)
    off += out_pad
    vec = jnp.concatenate([p.astype(jnp.float32) for p in pieces], axis=-1)  # (1, off)

    kernel = functools.partial(
        _mlp_decoder_kernel,
        n_hidden=n_hidden, segs=tuple(segs), b4_seg=b4_seg, inv_b=1.0 / B)

    vmem = pl.BlockSpec(memory_space=pltpu.MemorySpace.VMEM)
    n_in = 1 + len(w_in) + 1
    out_padded = pl.pallas_call(
        kernel,
        out_shape=jax.ShapeDtypeStruct((B, out_pad), jnp.float32),
        in_specs=[vmem] * n_in,
        out_specs=vmem,
    )(x_p, *w_in, vec)
    return out_padded[:, :out_dim]


def init_params(key, in_dim, out_dim, hidden_dims=None):
    """Deterministic synthetic parameters (PyTorch-Linear-style uniform init)."""
    if hidden_dims is None:
        hidden_dims = [128, 256, 128]
    dims = [in_dim] + hidden_dims
    params = []
    for li in range(len(dims) - 1):
        fan_in, fan_out = dims[li], dims[li + 1]
        key, kw, kb = jax.random.split(key, 3)
        bound = 1.0 / (fan_in ** 0.5)
        w = jax.random.uniform(kw, (fan_in, fan_out), jnp.float32, -bound, bound)
        b = jax.random.uniform(kb, (1, fan_out), jnp.float32, -bound, bound)
        gamma = jnp.ones((1, fan_out), jnp.float32)   # BN weight
        beta = jnp.zeros((1, fan_out), jnp.float32)   # BN bias
        params += [w, b, gamma, beta]
    fan_in = dims[-1]
    key, kw, kb = jax.random.split(key, 3)
    bound = 1.0 / (fan_in ** 0.5)
    w = jax.random.uniform(kw, (fan_in, out_dim), jnp.float32, -bound, bound)
    b = jax.random.uniform(kb, (1, out_dim), jnp.float32, -bound, bound)
    params += [w, b]
    return params


def reference_forward(x, params):
    """Pure-JAX f32 reference of the original module forward (with biases)."""
    w1, b1, g1, be1, w2, b2, g2, be2, w3, b3, g3, be3, w4, b4 = params
    h = x
    for (w, b, g, be) in ((w1, b1, g1, be1), (w2, b2, g2, be2), (w3, b3, g3, be3)):
        h = h @ w + b
        mean = jnp.mean(h, axis=0, keepdims=True)
        var = jnp.mean((h - mean) ** 2, axis=0, keepdims=True)
        h = (h - mean) * jax.lax.rsqrt(var + BN_EPS) * g + be
        h = jnp.maximum(h, 0.0)
    z = h @ w4 + b4
    return jax.nn.sigmoid(z)


if __name__ == "__main__":
    B, IN_DIM, OUT_DIM = 8, 32, 16

    key = jax.random.PRNGKey(0)
    kx, kp = jax.random.split(key)
    x = jax.random.normal(kx, (B, IN_DIM), jnp.float32)
    params = init_params(kp, IN_DIM, OUT_DIM)

    out = mlp_decoder_forward(x, params)
    out = jax.block_until_ready(out)

    ref = reference_forward(x, params)
    assert out.shape == (B, OUT_DIM)
    # bf16 MXU operands + approx reciprocal -> relaxed tolerance vs. the f32 reference.
    assert jnp.allclose(out, ref, atol=2e-2, rtol=2e-2), float(jnp.max(jnp.abs(out - ref)))

    print("KERNEL_OK")
</pallas_src>

<mosaic_0001>
module attributes {stable_mosaic.version = 11 : i64} {
  func.func @_mlp_decoder_kernel(%arg0: memref<8x128xf32, #tpu.memory_space<vmem>>, %arg1: memref<128x128xbf16, #tpu.memory_space<vmem>>, %arg2: memref<128x256xbf16, #tpu.memory_space<vmem>>, %arg3: memref<256x128xbf16, #tpu.memory_space<vmem>>, %arg4: memref<128x128xbf16, #tpu.memory_space<vmem>>, %arg5: memref<1x1152xf32, #tpu.memory_space<vmem>>, %arg6: memref<8x128xf32, #tpu.memory_space<vmem>>) attributes {dimension_semantics = [], scalar_prefetch = 0 : i64, scratch_operands = 0 : i64, tpu.core_type = #tpu.core_type<tc>} {
    %c0 = arith.constant 0 : index
    %c0_0 = arith.constant 0 : index
    %0 = vector.load %arg0[%c0, %c0_0] : memref<8x128xf32, #tpu.memory_space<vmem>>, vector<8x128xf32>
    %1 = arith.truncf %0 : vector<8x128xf32> to vector<8x128xbf16>
    %c0_1 = arith.constant 0 : index
    %c0_2 = arith.constant 0 : index
    %2 = vector.load %arg1[%c0_1, %c0_2] : memref<128x128xbf16, #tpu.memory_space<vmem>>, vector<128x128xbf16>
    %cst = arith.constant dense<0.000000e+00> : vector<8x128xf32>
    %3 = tpu.matmul %1, %2, %cst {dimension_numbers = #tpu.dot_dimension_numbers<[1], [0], [0], [1], [0, 0, 1, 1], [], []>} : vector<8x128xbf16>, vector<128x128xbf16>, vector<8x128xf32> -> vector<8x128xf32>
    %c0_3 = arith.constant 0 : index
    %c0_4 = arith.constant 0 : index
    %4 = vector.load %arg5[%c0_3, %c0_4] : memref<1x1152xf32, #tpu.memory_space<vmem>>, vector<1x128xf32>
    %c0_5 = arith.constant 0 : index
    %c128 = arith.constant 128 : index
    %5 = vector.load %arg5[%c0_5, %c128] : memref<1x1152xf32, #tpu.memory_space<vmem>>, vector<1x128xf32>
    %cst_6 = arith.constant dense<0.000000e+00> : vector<128xf32>
    %6 = vector.multi_reduction <add>, %3, %cst_6 [0] : vector<8x128xf32> to vector<128xf32>
    %7 = vector.shape_cast %6 : vector<128xf32> to vector<1x128xf32>
    %8 = arith.mulf %3, %3 : vector<8x128xf32>
    %cst_7 = arith.constant dense<0.000000e+00> : vector<128xf32>
    %9 = vector.multi_reduction <add>, %8, %cst_7 [0] : vector<8x128xf32> to vector<128xf32>
    %10 = vector.shape_cast %9 : vector<128xf32> to vector<1x128xf32>
    %cst_8 = arith.constant 1.250000e-01 : f32
    %11 = vector.broadcast %cst_8 : f32 to vector<1x128xf32>
    %12 = arith.mulf %7, %11 : vector<1x128xf32>
    %cst_9 = arith.constant 1.250000e-01 : f32
    %13 = vector.broadcast %cst_9 : f32 to vector<1x128xf32>
    %14 = arith.mulf %10, %13 : vector<1x128xf32>
    %15 = arith.mulf %12, %12 : vector<1x128xf32>
    %16 = arith.subf %14, %15 : vector<1x128xf32>
    %cst_10 = arith.constant 9.99999974E-6 : f32
    %17 = vector.broadcast %cst_10 : f32 to vector<1x128xf32>
    %18 = arith.addf %16, %17 : vector<1x128xf32>
    %19 = math.rsqrt %18 : vector<1x128xf32>
    %20 = arith.mulf %4, %19 : vector<1x128xf32>
    %21 = arith.mulf %12, %20 : vector<1x128xf32>
    %22 = arith.subf %5, %21 : vector<1x128xf32>
    %23 = vector.broadcast %20 : vector<1x128xf32> to vector<8x128xf32>
    %24 = arith.mulf %3, %23 : vector<8x128xf32>
    %25 = vector.broadcast %22 : vector<1x128xf32> to vector<8x128xf32>
    %26 = arith.addf %24, %25 : vector<8x128xf32>
    %cst_11 = arith.constant 0.000000e+00 : f32
    %27 = vector.broadcast %cst_11 : f32 to vector<8x128xf32>
    %28 = arith.maximumf %26, %27 : vector<8x128xf32>
    %29 = arith.truncf %28 : vector<8x128xf32> to vector<8x128xbf16>
    %c0_12 = arith.constant 0 : index
    %c0_13 = arith.constant 0 : index
    %30 = vector.load %arg2[%c0_12, %c0_13] : memref<128x256xbf16, #tpu.memory_space<vmem>>, vector<128x256xbf16>
    %cst_14 = arith.constant dense<0.000000e+00> : vector<8x256xf32>
    %31 = tpu.matmul %29, %30, %cst_14 {dimension_numbers = #tpu.dot_dimension_numbers<[1], [0], [0], [1], [0, 0, 1, 1], [], []>} : vector<8x128xbf16>, vector<128x256xbf16>, vector<8x256xf32> -> vector<8x256xf32>
    %c0_15 = arith.constant 0 : index
    %c256 = arith.constant 256 : index
    %32 = vector.load %arg5[%c0_15, %c256] : memref<1x1152xf32, #tpu.memory_space<vmem>>, vector<1x256xf32>
    %c0_16 = arith.constant 0 : index
    %c512 = arith.constant 512 : index
    %33 = vector.load %arg5[%c0_16, %c512] : memref<1x1152xf32, #tpu.memory_space<vmem>>, vector<1x256xf32>
    %cst_17 = arith.constant dense<0.000000e+00> : vector<256xf32>
    %34 = vector.multi_reduction <add>, %31, %cst_17 [0] : vector<8x256xf32> to vector<256xf32>
    %35 = vector.shape_cast %34 : vector<256xf32> to vector<1x256xf32>
    %36 = arith.mulf %31, %31 : vector<8x256xf32>
    %cst_18 = arith.constant dense<0.000000e+00> : vector<256xf32>
    %37 = vector.multi_reduction <add>, %36, %cst_18 [0] : vector<8x256xf32> to vector<256xf32>
    %38 = vector.shape_cast %37 : vector<256xf32> to vector<1x256xf32>
    %cst_19 = arith.constant 1.250000e-01 : f32
    %39 = vector.broadcast %cst_19 : f32 to vector<1x256xf32>
    %40 = arith.mulf %35, %39 : vector<1x256xf32>
    %cst_20 = arith.constant 1.250000e-01 : f32
    %41 = vector.broadcast %cst_20 : f32 to vector<1x256xf32>
    %42 = arith.mulf %38, %41 : vector<1x256xf32>
    %43 = arith.mulf %40, %40 : vector<1x256xf32>
    %44 = arith.subf %42, %43 : vector<1x256xf32>
    %cst_21 = arith.constant 9.99999974E-6 : f32
    %45 = vector.broadcast %cst_21 : f32 to vector<1x256xf32>
    %46 = arith.addf %44, %45 : vector<1x256xf32>
    %47 = math.rsqrt %46 : vector<1x256xf32>
    %48 = arith.mulf %32, %47 : vector<1x256xf32>
    %49 = arith.mulf %40, %48 : vector<1x256xf32>
    %50 = arith.subf %33, %49 : vector<1x256xf32>
    %51 = vector.broadcast %48 : vector<1x256xf32> to vector<8x256xf32>
    %52 = arith.mulf %31, %51 : vector<8x256xf32>
    %53 = vector.broadcast %50 : vector<1x256xf32> to vector<8x256xf32>
    %54 = arith.addf %52, %53 : vector<8x256xf32>
    %cst_22 = arith.constant 0.000000e+00 : f32
    %55 = vector.broadcast %cst_22 : f32 to vector<8x256xf32>
    %56 = arith.maximumf %54, %55 : vector<8x256xf32>
    %57 = arith.truncf %56 : vector<8x256xf32> to vector<8x256xbf16>
    %c0_23 = arith.constant 0 : index
    %c0_24 = arith.constant 0 : index
    %58 = vector.load %arg3[%c0_23, %c0_24] : memref<256x128xbf16, #tpu.memory_space<vmem>>, vector<256x128xbf16>
    %cst_25 = arith.constant dense<0.000000e+00> : vector<8x128xf32>
    %59 = tpu.matmul %57, %58, %cst_25 {dimension_numbers = #tpu.dot_dimension_numbers<[1], [0], [0], [1], [0, 0, 1, 1], [], []>} : vector<8x256xbf16>, vector<256x128xbf16>, vector<8x128xf32> -> vector<8x128xf32>
    %c0_26 = arith.constant 0 : index
    %c768 = arith.constant 768 : index
    %60 = vector.load %arg5[%c0_26, %c768] : memref<1x1152xf32, #tpu.memory_space<vmem>>, vector<1x128xf32>
    %c0_27 = arith.constant 0 : index
    %c896 = arith.constant 896 : index
    %61 = vector.load %arg5[%c0_27, %c896] : memref<1x1152xf32, #tpu.memory_space<vmem>>, vector<1x128xf32>
    %cst_28 = arith.constant dense<0.000000e+00> : vector<128xf32>
    %62 = vector.multi_reduction <add>, %59, %cst_28 [0] : vector<8x128xf32> to vector<128xf32>
    %63 = vector.shape_cast %62 : vector<128xf32> to vector<1x128xf32>
    %64 = arith.mulf %59, %59 : vector<8x128xf32>
    %cst_29 = arith.constant dense<0.000000e+00> : vector<128xf32>
    %65 = vector.multi_reduction <add>, %64, %cst_29 [0] : vector<8x128xf32> to vector<128xf32>
    %66 = vector.shape_cast %65 : vector<128xf32> to vector<1x128xf32>
    %cst_30 = arith.constant 1.250000e-01 : f32
    %67 = vector.broadcast %cst_30 : f32 to vector<1x128xf32>
    %68 = arith.mulf %63, %67 : vector<1x128xf32>
    %cst_31 = arith.constant 1.250000e-01 : f32
    %69 = vector.broadcast %cst_31 : f32 to vector<1x128xf32>
    %70 = arith.mulf %66, %69 : vector<1x128xf32>
    %71 = arith.mulf %68, %68 : vector<1x128xf32>
    %72 = arith.subf %70, %71 : vector<1x128xf32>
    %cst_32 = arith.constant 9.99999974E-6 : f32
    %73 = vector.broadcast %cst_32 : f32 to vector<1x128xf32>
    %74 = arith.addf %72, %73 : vector<1x128xf32>
    %75 = math.rsqrt %74 : vector<1x128xf32>
    %76 = arith.mulf %60, %75 : vector<1x128xf32>
    %77 = arith.mulf %68, %76 : vector<1x128xf32>
    %78 = arith.subf %61, %77 : vector<1x128xf32>
    %79 = vector.broadcast %76 : vector<1x128xf32> to vector<8x128xf32>
    %80 = arith.mulf %59, %79 : vector<8x128xf32>
    %81 = vector.broadcast %78 : vector<1x128xf32> to vector<8x128xf32>
    %82 = arith.addf %80, %81 : vector<8x128xf32>
    %cst_33 = arith.constant 0.000000e+00 : f32
    %83 = vector.broadcast %cst_33 : f32 to vector<8x128xf32>
    %84 = arith.maximumf %82, %83 : vector<8x128xf32>
    %85 = arith.truncf %84 : vector<8x128xf32> to vector<8x128xbf16>
    %c0_34 = arith.constant 0 : index
    %c0_35 = arith.constant 0 : index
    %86 = vector.load %arg4[%c0_34, %c0_35] : memref<128x128xbf16, #tpu.memory_space<vmem>>, vector<128x128xbf16>
    %cst_36 = arith.constant dense<0.000000e+00> : vector<8x128xf32>
    %87 = tpu.matmul %85, %86, %cst_36 {dimension_numbers = #tpu.dot_dimension_numbers<[1], [0], [0], [1], [0, 0, 1, 1], [], []>} : vector<8x128xbf16>, vector<128x128xbf16>, vector<8x128xf32> -> vector<8x128xf32>
    %c0_37 = arith.constant 0 : index
    %c1024 = arith.constant 1024 : index
    %88 = vector.load %arg5[%c0_37, %c1024] : memref<1x1152xf32, #tpu.memory_space<vmem>>, vector<1x128xf32>
    %89 = vector.broadcast %88 : vector<1x128xf32> to vector<8x128xf32>
    %90 = arith.addf %87, %89 : vector<8x128xf32>
    %cst_38 = arith.constant 0.000000e+00 : f32
    %91 = vector.broadcast %cst_38 : f32 to vector<8x128xf32>
    %92 = arith.subf %91, %90 : vector<8x128xf32>
    %93 = math.exp %92 : vector<8x128xf32>
    %cst_39 = arith.constant 1.000000e+00 : f32
    %94 = vector.broadcast %cst_39 : f32 to vector<8x128xf32>
    %95 = arith.addf %94, %93 : vector<8x128xf32>
    %96 = tpu.reciprocal %95 {approx = true} : vector<8x128xf32> -> vector<8x128xf32>
    %c0_40 = arith.constant 0 : index
    %c0_41 = arith.constant 0 : index
    %97 = vector.load %arg6[%c0_40, %c0_41] : memref<8x128xf32, #tpu.memory_space<vmem>>, vector<8x128xf32>
    tpu.vector_store %arg6[%c0_40, %c0_41], %96 {strides = array<i32>} : memref<8x128xf32, #tpu.memory_space<vmem>>, vector<8x128xf32>,
    return
  }
}

</mosaic_0001>

<llo_original>
// kernel: tpu_custom_call.1
$region0: #{tpu_custom_call.1}
  #allocation0 [shape = 'u32[]', space=smem, size = 0x4, offset = 0x4, fixed_abs, tag = 'smem constant byte address 0x4 - core index']
  #allocation1 [shape = 'u32[144,128]{1,0:T(1,128)}', space=vmem, size = 0x12000, scoped, tag = 'internal scratch']
  %s0 = inlined_call_operand.hbm [shape: f32[8,128], index: 0, kind: input, shape index: {}]
  %s1 = inlined_call_operand.hbm [shape: bf16[128,128], index: 1, kind: input, shape index: {}]
  %s2 = inlined_call_operand.hbm [shape: bf16[128,256], index: 2, kind: input, shape index: {}]
  %s3 = inlined_call_operand.hbm [shape: bf16[256,128], index: 3, kind: input, shape index: {}]
  %s4 = inlined_call_operand.hbm [shape: bf16[128,128], index: 4, kind: input, shape index: {}]
  %s5 = inlined_call_operand.vmem [shape: f32[1,1152], index: 5, kind: input, shape index: {}]
  %s6 = inlined_call_operand.hbm [shape: f32[8,128], index: 6, kind: output, shape index: {}]
  %s7 = sld [smem:[#allocation0]]
  $region54: #{tpu_custom_call.1} parent=0
    _
  %s9 = ssub.s32 1, %s7
  %s10 = scalar_select 0, %s9, %s7
  $region1: #{tpu_custom_call.1} parent=0
    #allocation2 [shape = 'u8[4096]{0}', space=vmem, size = 0x1000, scoped, tag = 'input window, operand 0, single buffered']
    #allocation3 [shape = 's32[1]{0}', space=sflag, size = 0x4, scoped, tag = 'scoped memory for tpu_custom_call.1']
    #allocation4 [shape = 's32[1]{0}', space=sflag, size = 0x4, scoped, tag = 'scoped memory for tpu_custom_call.1']
    #allocation5 [shape = 'u8[32768]{0}', space=vmem, size = 0x8000, scoped, tag = 'input window, operand 1, single buffered']
    #allocation6 [shape = 's32[1]{0}', space=sflag, size = 0x4, scoped, tag = 'scoped memory for tpu_custom_call.1']
    #allocation7 [shape = 'u8[65536]{0}', space=vmem, size = 0x10000, scoped, tag = 'input window, operand 2, single buffered']
    #allocation8 [shape = 'u8[65536]{0}', space=vmem, size = 0x10000, scoped, tag = 'input window, operand 3, single buffered']
    #allocation9 [shape = 's32[1]{0}', space=sflag, size = 0x4, scoped, tag = 'scoped memory for tpu_custom_call.1']
    #allocation10 [shape = 'u8[32768]{0}', space=vmem, size = 0x8000, scoped, tag = 'input window, operand 4, single buffered']
    #allocation11 [shape = 'u8[4096]{0}', space=vmem, size = 0x1000, scoped, tag = 'output window, operand 0, single buffered']
    %11 = vsyncpa [#allocation3], 0
    %12 = vsyncpa [#allocation6], 0
    %13 = vsyncpa [#allocation9], 0
    %14 = vsyncpa [#allocation4], 0
    // Predicated region
    $region2: #{tpu_custom_call.1} parent=1 // pred_check
      _
    $region3: #{tpu_custom_call.1} parent=1 // pred_check_branch
      %16 = sbr.rel (0) target = $region5
    $region4: #{tpu_custom_call.1} parent=1 // pred_region
      %s18 = ssub.s32 128, 128
      %19 = vsyncadd [#allocation3], %s18
      %s21 = sshll.u32 [#allocation2], 4
      %s22 = int_to_ptr.vmem [resolvable:$true] %s21
      %24 = dma.hbm_to_vmem [thread:$0]  %s0, 128, %s22, [#allocation3]
    $region5: #{tpu_custom_call.1} parent=1 // pred_fallthru
      _
    // Predicated region
    $region6: #{tpu_custom_call.1} parent=1 // pred_check
      _
    $region7: #{tpu_custom_call.1} parent=1 // pred_check_branch
      %26 = sbr.rel (0) target = $region9
    $region8: #{tpu_custom_call.1} parent=1 // pred_region
      %s28 = ssub.s32 1024, 1024
      %29 = vsyncadd [#allocation6], %s28
      %s30 = sshll.u32 [#allocation5], 4
      %s31 = int_to_ptr.vmem [resolvable:$true] %s30
      %36 = dma.hbm_to_vmem [thread:$0]  %s1, 1024, %s31, [#allocation6], 64, 64, 4
    $region9: #{tpu_custom_call.1} parent=1 // pred_fallthru
      _
    // Predicated region
    $region10: #{tpu_custom_call.1} parent=1 // pred_check
      _
    $region11: #{tpu_custom_call.1} parent=1 // pred_check_branch
      %38 = sbr.rel (0) target = $region13
    $region12: #{tpu_custom_call.1} parent=1 // pred_region
      %s40 = ssub.s32 2048, 2048
      %41 = vsyncadd [#allocation6], %s40
      %s42 = sshll.u32 [#allocation7], 4
      %s43 = int_to_ptr.vmem [resolvable:$true] %s42
      %48 = dma.hbm_to_vmem [thread:$0]  %s2, 2048, %s43, [#allocation6], 128, 128, 8
    $region13: #{tpu_custom_call.1} parent=1 // pred_fallthru
      _
    // Predicated region
    $region14: #{tpu_custom_call.1} parent=1 // pred_check
      _
    $region15: #{tpu_custom_call.1} parent=1 // pred_check_branch
      %50 = sbr.rel (0) target = $region17
    $region16: #{tpu_custom_call.1} parent=1 // pred_region
      %s52 = ssub.s32 2048, 2048
      %53 = vsyncadd [#allocation9], %s52
      %s54 = sshll.u32 [#allocation8], 4
      %s55 = int_to_ptr.vmem [resolvable:$true] %s54
      %60 = dma.hbm_to_vmem [thread:$0]  %s3, 2048, %s55, [#allocation9], 64, 64, 4
    $region17: #{tpu_custom_call.1} parent=1 // pred_fallthru
      _
    // Predicated region
    $region18: #{tpu_custom_call.1} parent=1 // pred_check
      _
    $region19: #{tpu_custom_call.1} parent=1 // pred_check_branch
      %62 = sbr.rel (0) target = $region21
    $region20: #{tpu_custom_call.1} parent=1 // pred_region
      %s64 = ssub.s32 1024, 1024
      %65 = vsyncadd [#allocation9], %s64
      %s66 = sshll.u32 [#allocation10], 4
      %s67 = int_to_ptr.vmem [resolvable:$true] %s66
      %72 = dma.hbm_to_vmem [thread:$0]  %s4, 1024, %s67, [#allocation9], 64, 64, 4
    $region21: #{tpu_custom_call.1} parent=1 // pred_fallthru
      _
    // Predicated region
    $region22: #{tpu_custom_call.1} parent=1 // pred_check
      _
    $region23: #{tpu_custom_call.1} parent=1 // pred_check_branch
      %74 = sbr.rel (0) target = $region25
    $region24: #{tpu_custom_call.1} parent=1 // pred_region
      _
    $region25: #{tpu_custom_call.1} parent=1 // pred_fallthru
      _
    // Predicated region
    $region26: #{tpu_custom_call.1} parent=1 // pred_check
      _
    $region27: #{tpu_custom_call.1} parent=1 // pred_check_branch
      %76 = sbr.rel (0) target = $region29
    $region28: #{tpu_custom_call.1} parent=1 // pred_region
      %77 = dma.done [#allocation3], 128
    $region29: #{tpu_custom_call.1} parent=1 // pred_fallthru
      _
    // Predicated region
    $region30: #{tpu_custom_call.1} parent=1 // pred_check
      _
    $region31: #{tpu_custom_call.1} parent=1 // pred_check_branch
      %79 = sbr.rel (0) target = $region33
    $region32: #{tpu_custom_call.1} parent=1 // pred_region
      %80 = dma.done [#allocation6], 1024
    $region33: #{tpu_custom_call.1} parent=1 // pred_fallthru
      _
    // Predicated region
    $region34: #{tpu_custom_call.1} parent=1 // pred_check
      _
    $region35: #{tpu_custom_call.1} parent=1 // pred_check_branch
      %82 = sbr.rel (0) target = $region37
    $region36: #{tpu_custom_call.1} parent=1 // pred_region
      %83 = dma.done [#allocation6], 2048
    $region37: #{tpu_custom_call.1} parent=1 // pred_fallthru
      _
    // Predicated region
    $region38: #{tpu_custom_call.1} parent=1 // pred_check
      _
    $region39: #{tpu_custom_call.1} parent=1 // pred_check_branch
      %85 = sbr.rel (0) target = $region41
    $region40: #{tpu_custom_call.1} parent=1 // pred_region
      %86 = dma.done [#allocation9], 2048
    $region41: #{tpu_custom_call.1} parent=1 // pred_fallthru
      _
    // Predicated region
    $region42: #{tpu_custom_call.1} parent=1 // pred_check
      _
    $region43: #{tpu_custom_call.1} parent=1 // pred_check_branch
      %88 = sbr.rel (0) target = $region45
    $region44: #{tpu_custom_call.1} parent=1 // pred_region
      %89 = dma.done [#allocation9], 1024
    $region45: #{tpu_custom_call.1} parent=1 // pred_fallthru
      _
    %v91 = vld [vmem:[#allocation2] sm:$0xff]
    %v92 = vpack.c.bf16 %v91, %v91
    %v93 = vld [vmem:[#allocation5] sm:$0xf]
    %v94 = vld [vmem:[#allocation5 + $0x4] sm:$0xf]
    %v95 = vld [vmem:[#allocation5 + $0x8] sm:$0xf]
    %v96 = vld [vmem:[#allocation5 + $0xc] sm:$0xf]
    %v97 = vld [vmem:[#allocation5 + $0x10] sm:$0xf]
    %v98 = vld [vmem:[#allocation5 + $0x14] sm:$0xf]
    %v99 = vld [vmem:[#allocation5 + $0x18] sm:$0xf]
    %v100 = vld [vmem:[#allocation5 + $0x1c] sm:$0xf]
    %v101 = vld [vmem:[#allocation5 + $0x20] sm:$0xf]
    %v102 = vld [vmem:[#allocation5 + $0x24] sm:$0xf]
    %v103 = vld [vmem:[#allocation5 + $0x28] sm:$0xf]
    %v104 = vld [vmem:[#allocation5 + $0x2c] sm:$0xf]
    %v105 = vld [vmem:[#allocation5 + $0x30] sm:$0xf]
    %v106 = vld [vmem:[#allocation5 + $0x34] sm:$0xf]
    %v107 = vld [vmem:[#allocation5 + $0x38] sm:$0xf]
    %v108 = vld [vmem:[#allocation5 + $0x3c] sm:$0xf]
    %v125 = vunpack.c.l.b16 %v93
    %v126 = vunpack.c.l.b16 %v94
    %v127 = vunpack.c.l.b16 %v95
    %v128 = vunpack.c.l.b16 %v96
    %v129 = vunpack.c.l.b16 %v97
    %v130 = vunpack.c.l.b16 %v98
    %v131 = vunpack.c.l.b16 %v99
    %v132 = vunpack.c.l.b16 %v100
    %v133 = vunpack.c.l.b16 %v101
    %v134 = vunpack.c.l.b16 %v102
    %v135 = vunpack.c.l.b16 %v103
    %v136 = vunpack.c.l.b16 %v104
    %v137 = vunpack.c.l.b16 %v105
    %v138 = vunpack.c.l.b16 %v106
    %v139 = vunpack.c.l.b16 %v107
    %v140 = vunpack.c.l.b16 %v108
    %v141 = vpack.c.b16 %v126, %v125
    %v142 = vpack.c.b16 %v128, %v127
    %v143 = vpack.c.b16 %v130, %v129
    %v144 = vpack.c.b16 %v132, %v131
    %v145 = vpack.c.b16 %v134, %v133
    %v146 = vpack.c.b16 %v136, %v135
    %v147 = vpack.c.b16 %v138, %v137
    %v148 = vpack.c.b16 %v140, %v139
    %157 = vmatprep.subr.bf16.mxu0 0
    %158 = vmatpush1.bf16.msra.mxu0 %v141
    %159 = vmatprep.subr.bf16.mxu0 0
    %160 = vmatpush1.bf16.msra.mxu0 %v142
    %161 = vmatprep.subr.bf16.mxu0 0
    %162 = vmatpush1.bf16.msra.mxu0 %v143
    %163 = vmatprep.subr.bf16.mxu0 0
    %164 = vmatpush1.bf16.msra.mxu0 %v144
    %165 = vmatprep.subr.bf16.mxu0 0
    %166 = vmatpush1.bf16.msra.mxu0 %v145
    %167 = vmatprep.subr.bf16.mxu0 0
    %168 = vmatpush1.bf16.msra.mxu0 %v146
    %169 = vmatprep.subr.bf16.mxu0 0
    %170 = vmatpush1.bf16.msra.mxu0 %v147
    %171 = vmatprep.subr.bf16.mxu0 0
    %172 = vmatpush1.bf16.msra.mxu0 %v148
    %173 = vmatprep.subr.bf16.mxu0 0
    %174 = vmatpush1.bf16.msra.mxu0 0
    %175 = vmatprep.subr.bf16.mxu0 0
    %176 = vmatpush1.bf16.msra.mxu0 0
    %177 = vmatprep.subr.bf16.mxu0 0
    %178 = vmatpush1.bf16.msra.mxu0 0
    %179 = vmatprep.subr.bf16.mxu0 0
    %180 = vmatpush1.bf16.msra.mxu0 0
    %181 = vmatprep.subr.bf16.mxu0 0
    %182 = vmatpush1.bf16.msra.mxu0 0
    %183 = vmatprep.subr.bf16.mxu0 0
    %184 = vmatpush1.bf16.msra.mxu0 0
    %185 = vmatprep.subr.bf16.mxu0 0
    %186 = vmatpush1.bf16.msra.mxu0 0
    %187 = vmatprep.subr.bf16.mxu0 0
    %188 = vmatpush1.bf16.msra.mxu0 0
    %189 = vmatprep.mubr.bf16.mxu0 0
    %190 = vmatmul.mubr.bf16.gmra.mrb[0].mxu0 %v92
    %v191 = vpop.f32.mrb[0].mxu0
    %v192 = vadd.f32 0.0, %v191
    %v193 = vpop.f32.mrb[0].mxu0
    %v194 = vpop.f32.mrb[0].mxu0
    %v195 = vpop.f32.mrb[0].mxu0
    %196 = vdwg.mxu0
    %v197 = vld [vmem:[%s5] sm:$0x1]
    %v198 = vld [vmem:[%s5 + $0x1] sm:$0x1]
    %v199 = vrot.slane %v192, 4
    %v200 = vadd.f32 %v192, %v199
    %v201 = vrot.slane %v200, 2
    %v202 = vadd.f32 %v200, %v201
    %v203 = vrot.slane %v202, 1
    %v204 = vadd.f32 %v202, %v203
    %v205 = vmul.f32 %v192, %v192
    %v206 = vrot.slane %v205, 4
    %v207 = vadd.f32 %v205, %v206
    %v208 = vrot.slane %v207, 2
    %v209 = vadd.f32 %v207, %v208
    %v210 = vrot.slane %v209, 1
    %v211 = vadd.f32 %v209, %v210
    %v212 = vmul.f32 %v204, 0.125
    %v213 = vmul.f32 %v211, 0.125
    %v214 = vmul.f32 %v212, %v212
    %v215 = vsub.f32 %v213, %v214
    %v216 = vadd.f32 %v215, 1e-05
    %v217 = vrsqrt.pop %v216
    %v218 = vmul.f32 %v197, %v217
    %v219 = vmul.f32 %v212, %v218
    %v220 = vsub.f32 %v198, %v219
    %v222 = vlaneseq
    %v223 = vshrl.u32 %v222, 7
    %v224 = vsub.s32 0, %v223
    %v225 = vrot.slane %v218, %v224
    %v227 = vmul.f32 %v192, %v225
    %v229 = vlaneseq
    %v230 = vshrl.u32 %v229, 7
    %v231 = vsub.s32 0, %v230
    %v232 = vrot.slane %v220, %v231
    %v234 = vadd.f32 %v227, %v232
    %v235 = vmax.f32 %v234, 0.0
    %v236 = vpack.c.bf16 %v235, %v235
    %v237 = vld [vmem:[#allocation7] sm:$0xff]
    %v238 = vld [vmem:[#allocation7 + $0x8] sm:$0xff]
    %v239 = vld [vmem:[#allocation7 + $0x10] sm:$0xff]
    %v240 = vld [vmem:[#allocation7 + $0x18] sm:$0xff]
    %v241 = vld [vmem:[#allocation7 + $0x20] sm:$0xff]
    %v242 = vld [vmem:[#allocation7 + $0x28] sm:$0xff]
    %v243 = vld [vmem:[#allocation7 + $0x30] sm:$0xff]
    %v244 = vld [vmem:[#allocation7 + $0x38] sm:$0xff]
    %v245 = vld [vmem:[#allocation7 + $0x40] sm:$0xff]
    %v246 = vld [vmem:[#allocation7 + $0x48] sm:$0xff]
    %v247 = vld [vmem:[#allocation7 + $0x50] sm:$0xff]
    %v248 = vld [vmem:[#allocation7 + $0x58] sm:$0xff]
    %v249 = vld [vmem:[#allocation7 + $0x60] sm:$0xff]
    %v250 = vld [vmem:[#allocation7 + $0x68] sm:$0xff]
    %v251 = vld [vmem:[#allocation7 + $0x70] sm:$0xff]
    %v252 = vld [vmem:[#allocation7 + $0x78] sm:$0xff]
    %v269 = vunpack.c.l.b16 %v237
    %v270 = vunpack.c.h.b16 %v237
    %v271 = vunpack.c.l.b16 %v238
    %v272 = vunpack.c.h.b16 %v238
    %v273 = vunpack.c.l.b16 %v239
    %v274 = vunpack.c.h.b16 %v239
    %v275 = vunpack.c.l.b16 %v240
    %v276 = vunpack.c.h.b16 %v240
    %v277 = vunpack.c.l.b16 %v241
    %v278 = vunpack.c.h.b16 %v241
    %v279 = vunpack.c.l.b16 %v242
    %v280 = vunpack.c.h.b16 %v242
    %v281 = vunpack.c.l.b16 %v243
    %v282 = vunpack.c.h.b16 %v243
    %v283 = vunpack.c.l.b16 %v244
    %v284 = vunpack.c.h.b16 %v244
    %v285 = vunpack.c.l.b16 %v245
    %v286 = vunpack.c.h.b16 %v245
    %v287 = vunpack.c.l.b16 %v246
    %v288 = vunpack.c.h.b16 %v246
    %v289 = vunpack.c.l.b16 %v247
    %v290 = vunpack.c.h.b16 %v247
    %v291 = vunpack.c.l.b16 %v248
    %v292 = vunpack.c.h.b16 %v248
    %v293 = vunpack.c.l.b16 %v249
    %v294 = vunpack.c.h.b16 %v249
    %v295 = vunpack.c.l.b16 %v250
    %v296 = vunpack.c.h.b16 %v250
    %v297 = vunpack.c.l.b16 %v251
    %v298 = vunpack.c.h.b16 %v251
    %v299 = vunpack.c.l.b16 %v252
    %v300 = vunpack.c.h.b16 %v252
    %v301 = vpack.c.b16 %v271, %v269
    %v302 = vpack.c.b16 %v272, %v270
    %v303 = vpack.c.b16 %v275, %v273
    %v304 = vpack.c.b16 %v276, %v274
    %v305 = vpack.c.b16 %v279, %v277
    %v306 = vpack.c.b16 %v280, %v278
    %v307 = vpack.c.b16 %v283, %v281
    %v308 = vpack.c.b16 %v284, %v282
    %v309 = vpack.c.b16 %v287, %v285
    %v310 = vpack.c.b16 %v288, %v286
    %v311 = vpack.c.b16 %v291, %v289
    %v312 = vpack.c.b16 %v292, %v290
    %v313 = vpack.c.b16 %v295, %v293
    %v314 = vpack.c.b16 %v296, %v294
    %v315 = vpack.c.b16 %v299, %v297
    %v316 = vpack.c.b16 %v300, %v298
    %333 = vmatprep.subr.bf16.mxu0 %v302
    %334 = vmatpush1.bf16.msra.mxu0 %v301
    %335 = vmatprep.subr.bf16.mxu0 %v304
    %336 = vmatpush1.bf16.msra.mxu0 %v303
    %337 = vmatprep.subr.bf16.mxu0 %v306
    %338 = vmatpush1.bf16.msra.mxu0 %v305
    %339 = vmatprep.subr.bf16.mxu0 %v308
    %340 = vmatpush1.bf16.msra.mxu0 %v307
    %341 = vmatprep.subr.bf16.mxu0 %v310
    %342 = vmatpush1.bf16.msra.mxu0 %v309
    %343 = vmatprep.subr.bf16.mxu0 %v312
    %344 = vmatpush1.bf16.msra.mxu0 %v311
    %345 = vmatprep.subr.bf16.mxu0 %v314
    %346 = vmatpush1.bf16.msra.mxu0 %v313
    %347 = vmatprep.subr.bf16.mxu0 %v316
    %348 = vmatpush1.bf16.msra.mxu0 %v315
    %349 = vmatprep.subr.bf16.mxu0 0
    %350 = vmatpush1.bf16.msra.mxu0 0
    %351 = vmatprep.subr.bf16.mxu0 0
    %352 = vmatpush1.bf16.msra.mxu0 0
    %353 = vmatprep.subr.bf16.mxu0 0
    %354 = vmatpush1.bf16.msra.mxu0 0
    %355 = vmatprep.subr.bf16.mxu0 0
    %356 = vmatpush1.bf16.msra.mxu0 0
    %357 = vmatprep.subr.bf16.mxu0 0
    %358 = vmatpush1.bf16.msra.mxu0 0
    %359 = vmatprep.subr.bf16.mxu0 0
    %360 = vmatpush1.bf16.msra.mxu0 0
    %361 = vmatprep.subr.bf16.mxu0 0
    %362 = vmatpush1.bf16.msra.mxu0 0
    %363 = vmatprep.subr.bf16.mxu0 0
    %364 = vmatpush1.bf16.msra.mxu0 0
    %365 = vmatprep.mubr.bf16.mxu0 0
    %366 = vmatmul.mubr.bf16.gmra.mrb[0].mxu0 %v236
    %v367 = vpop.f32.mrb[0].mxu0
    %v368 = vadd.f32 0.0, %v367
    %v369 = vpop.f32.mrb[0].mxu0
    %v370 = vadd.f32 0.0, %v369
    %v371 = vpop.f32.mrb[0].mxu0
    %v372 = vpop.f32.mrb[0].mxu0
    %373 = vdwg.mxu0
    %v374 = vld [vmem:[%s5 + $0x2] sm:$0x3]
    %v375 = vld [vmem:[%s5 + $0x4] sm:$0x3]
    %v376 = vrot.slane %v368, 4
    %v377 = vadd.f32 %v368, %v376
    %v378 = vrot.slane %v377, 2
    %v379 = vadd.f32 %v377, %v378
    %v380 = vrot.slane %v379, 1
    %v381 = vadd.f32 %v379, %v380
    %v382 = vrot.slane %v370, 4
    %v383 = vadd.f32 %v370, %v382
    %v384 = vrot.slane %v383, 2
    %v385 = vadd.f32 %v383, %v384
    %v386 = vrot.slane %v385, 1
    %v387 = vadd.f32 %v385, %v386
    %v388 = vmul.f32 %v368, %v368
    %v389 = vmul.f32 %v370, %v370
    %v390 = vrot.slane %v388, 4
    %v391 = vadd.f32 %v388, %v390
    %v392 = vrot.slane %v391, 2
    %v393 = vadd.f32 %v391, %v392
    %v394 = vrot.slane %v393, 1
    %v395 = vadd.f32 %v393, %v394
    %v396 = vrot.slane %v389, 4
    %v397 = vadd.f32 %v389, %v396
    %v398 = vrot.slane %v397, 2
    %v399 = vadd.f32 %v397, %v398
    %v400 = vrot.slane %v399, 1
    %v401 = vadd.f32 %v399, %v400
    %v402 = vmul.f32 %v381, 0.125
    %v403 = vmul.f32 %v387, 0.125
    %v404 = vmul.f32 %v395, 0.125
    %v405 = vmul.f32 %v401, 0.125
    %v406 = vmul.f32 %v402, %v402
    %v407 = vmul.f32 %v403, %v403
    %v408 = vsub.f32 %v404, %v406
    %v409 = vsub.f32 %v405, %v407
    %v410 = vadd.f32 %v408, 1e-05
    %v411 = vadd.f32 %v409, 1e-05
    %v412 = vrsqrt.pop %v410
    %v413 = vrsqrt.pop %v411
    %v416 = vcombine.low %v412, %v413
    %v418 = vunpack.c.l.s4 1966171168
    %v419 = vunpack.c.0.s8 %v418
    %v420 = vlaneseq
    %v421 = vshrl.u32 %v420, 7
    %v422 = vsub.s32 %v419, %v421
    %v423 = vrot.slane %v416, %v422
    %v425 = vunpack.c.l.s4 1966171168
    %v426 = vunpack.c.0.s8 %v425
    %v427 = vlaneseq
    %v428 = vshrl.u32 %v427, 7
    %v429 = vsub.s32 %v426, %v428
    %v430 = vrot.slane %v423, %v429
    %v432 = vmul.f32 %v374, %v430
    %v434 = vlaneseq
    %v435 = vshrl.u32 %v434, 7
    %v436 = vsub.s32 0, %v435
    %v437 = vrot.slane %v432, %v436
    %v438 = vlaneseq
    %v439 = vshrl.u32 %v438, 7
    %v440 = vsub.s32 1, %v439
    %v441 = vrot.slane %v432, %v440
    %v444 = vmul.f32 %v402, %v437
    %v445 = vmul.f32 %v403, %v441
    %v448 = vcombine.low %v444, %v445
    %v450 = vunpack.c.l.s4 1966171168
    %v451 = vunpack.c.0.s8 %v450
    %v452 = vlaneseq
    %v453 = vshrl.u32 %v452, 7
    %v454 = vsub.s32 %v451, %v453
    %v455 = vrot.slane %v448, %v454
    %v457 = vunpack.c.l.s4 1966171168
    %v458 = vunpack.c.0.s8 %v457
    %v459 = vlaneseq
    %v460 = vshrl.u32 %v459, 7
    %v461 = vsub.s32 %v458, %v460
    %v462 = vrot.slane %v455, %v461
    %v464 = vsub.f32 %v375, %v462
    %v465 = vmul.f32 %v368, %v437
    %v466 = vmul.f32 %v370, %v441
    %v468 = vlaneseq
    %v469 = vshrl.u32 %v468, 7
    %v470 = vsub.s32 0, %v469
    %v471 = vrot.slane %v464, %v470
    %v472 = vlaneseq
    %v473 = vshrl.u32 %v472, 7
    %v474 = vsub.s32 1, %v473
    %v475 = vrot.slane %v464, %v474
    %v478 = vadd.f32 %v465, %v471
    %v479 = vadd.f32 %v466, %v475
    %v480 = vmax.f32 %v478, 0.0
    %v481 = vmax.f32 %v479, 0.0
    %v482 = vpack.c.bf16 %v480, %v480
    %v483 = vpack.c.bf16 %v481, %v481
    %v484 = vld [vmem:[#allocation8] sm:$0xf]
    %v485 = vld [vmem:[#allocation8 + $0x4] sm:$0xf]
    %v486 = vld [vmem:[#allocation8 + $0x8] sm:$0xf]
    %v487 = vld [vmem:[#allocation8 + $0xc] sm:$0xf]
    %v488 = vld [vmem:[#allocation8 + $0x10] sm:$0xf]
    %v489 = vld [vmem:[#allocation8 + $0x14] sm:$0xf]
    %v490 = vld [vmem:[#allocation8 + $0x18] sm:$0xf]
    %v491 = vld [vmem:[#allocation8 + $0x1c] sm:$0xf]
    %v492 = vld [vmem:[#allocation8 + $0x20] sm:$0xf]
    %v493 = vld [vmem:[#allocation8 + $0x24] sm:$0xf]
    %v494 = vld [vmem:[#allocation8 + $0x28] sm:$0xf]
    %v495 = vld [vmem:[#allocation8 + $0x2c] sm:$0xf]
    %v496 = vld [vmem:[#allocation8 + $0x30] sm:$0xf]
    %v497 = vld [vmem:[#allocation8 + $0x34] sm:$0xf]
    %v498 = vld [vmem:[#allocation8 + $0x38] sm:$0xf]
    %v499 = vld [vmem:[#allocation8 + $0x3c] sm:$0xf]
    %v500 = vld [vmem:[#allocation8 + $0x40] sm:$0xf]
    %v501 = vld [vmem:[#allocation8 + $0x44] sm:$0xf]
    %v502 = vld [vmem:[#allocation8 + $0x48] sm:$0xf]
    %v503 = vld [vmem:[#allocation8 + $0x4c] sm:$0xf]
    %v504 = vld [vmem:[#allocation8 + $0x50] sm:$0xf]
    %v505 = vld [vmem:[#allocation8 + $0x54] sm:$0xf]
    %v506 = vld [vmem:[#allocation8 + $0x58] sm:$0xf]
    %v507 = vld [vmem:[#allocation8 + $0x5c] sm:$0xf]
    %v508 = vld [vmem:[#allocation8 + $0x60] sm:$0xf]
    %v509 = vld [vmem:[#allocation8 + $0x64] sm:$0xf]
    %v510 = vld [vmem:[#allocation8 + $0x68] sm:$0xf]
    %v511 = vld [vmem:[#allocation8 + $0x6c] sm:$0xf]
    %v512 = vld [vmem:[#allocation8 + $0x70] sm:$0xf]
    %v513 = vld [vmem:[#allocation8 + $0x74] sm:$0xf]
    %v514 = vld [vmem:[#allocation8 + $0x78] sm:$0xf]
    %v515 = vld [vmem:[#allocation8 + $0x7c] sm:$0xf]
    %v548 = vunpack.c.l.b16 %v484
    %v549 = vunpack.c.l.b16 %v485
    %v550 = vunpack.c.l.b16 %v486
    %v551 = vunpack.c.l.b16 %v487
    %v552 = vunpack.c.l.b16 %v488
    %v553 = vunpack.c.l.b16 %v489
    %v554 = vunpack.c.l.b16 %v490
    %v555 = vunpack.c.l.b16 %v491
    %v556 = vunpack.c.l.b16 %v492
    %v557 = vunpack.c.l.b16 %v493
    %v558 = vunpack.c.l.b16 %v494
    %v559 = vunpack.c.l.b16 %v495
    %v560 = vunpack.c.l.b16 %v496
    %v561 = vunpack.c.l.b16 %v497
    %v562 = vunpack.c.l.b16 %v498
    %v563 = vunpack.c.l.b16 %v499
    %v564 = vunpack.c.l.b16 %v500
    %v565 = vunpack.c.l.b16 %v501
    %v566 = vunpack.c.l.b16 %v502
    %v567 = vunpack.c.l.b16 %v503
    %v568 = vunpack.c.l.b16 %v504
    %v569 = vunpack.c.l.b16 %v505
    %v570 = vunpack.c.l.b16 %v506
    %v571 = vunpack.c.l.b16 %v507
    %v572 = vunpack.c.l.b16 %v508
    %v573 = vunpack.c.l.b16 %v509
    %v574 = vunpack.c.l.b16 %v510
    %v575 = vunpack.c.l.b16 %v511
    %v576 = vunpack.c.l.b16 %v512
    %v577 = vunpack.c.l.b16 %v513
    %v578 = vunpack.c.l.b16 %v514
    %v579 = vunpack.c.l.b16 %v515
    %v580 = vpack.c.b16 %v549, %v548
    %v581 = vpack.c.b16 %v551, %v550
    %v582 = vpack.c.b16 %v553, %v552
    %v583 = vpack.c.b16 %v555, %v554
    %v584 = vpack.c.b16 %v557, %v556
    %v585 = vpack.c.b16 %v559, %v558
    %v586 = vpack.c.b16 %v561, %v560
    %v587 = vpack.c.b16 %v563, %v562
    %v588 = vpack.c.b16 %v565, %v564
    %v589 = vpack.c.b16 %v567, %v566
    %v590 = vpack.c.b16 %v569, %v568
    %v591 = vpack.c.b16 %v571, %v570
    %v592 = vpack.c.b16 %v573, %v572
    %v593 = vpack.c.b16 %v575, %v574
    %v594 = vpack.c.b16 %v577, %v576
    %v595 = vpack.c.b16 %v579, %v578
    %612 = vmatprep.subr.bf16.mxu0 0
    %613 = vmatpush1.bf16.msra.mxu0 %v580
    %614 = vmatprep.subr.bf16.mxu0 0
    %615 = vmatpush1.bf16.msra.mxu0 %v581
    %616 = vmatprep.subr.bf16.mxu0 0
    %617 = vmatpush1.bf16.msra.mxu0 %v582
    %618 = vmatprep.subr.bf16.mxu0 0
    %619 = vmatpush1.bf16.msra.mxu0 %v583
    %620 = vmatprep.subr.bf16.mxu0 0
    %621 = vmatpush1.bf16.msra.mxu0 %v584
    %622 = vmatprep.subr.bf16.mxu0 0
    %623 = vmatpush1.bf16.msra.mxu0 %v585
    %624 = vmatprep.subr.bf16.mxu0 0
    %625 = vmatpush1.bf16.msra.mxu0 %v586
    %626 = vmatprep.subr.bf16.mxu0 0
    %627 = vmatpush1.bf16.msra.mxu0 %v587
    %628 = vmatprep.subr.bf16.mxu0 0
    %629 = vmatpush1.bf16.msra.mxu0 %v588
    %630 = vmatprep.subr.bf16.mxu0 0
    %631 = vmatpush1.bf16.msra.mxu0 %v589
    %632 = vmatprep.subr.bf16.mxu0 0
    %633 = vmatpush1.bf16.msra.mxu0 %v590
    %634 = vmatprep.subr.bf16.mxu0 0
    %635 = vmatpush1.bf16.msra.mxu0 %v591
    %636 = vmatprep.subr.bf16.mxu0 0
    %637 = vmatpush1.bf16.msra.mxu0 %v592
    %638 = vmatprep.subr.bf16.mxu0 0
    %639 = vmatpush1.bf16.msra.mxu0 %v593
    %640 = vmatprep.subr.bf16.mxu0 0
    %641 = vmatpush1.bf16.msra.mxu0 %v594
    %642 = vmatprep.subr.bf16.mxu0 0
    %643 = vmatpush1.bf16.msra.mxu0 %v595
    %644 = vmatprep.mubr.bf16.mxu0 %v483
    %645 = vmatmul.mubr.bf16.gmra.mrb[0].mxu0 %v482
    %v646 = vpop.f32.mrb[0].mxu0
    %v647 = vadd.f32 0.0, %v646
    %v648 = vpop.f32.mrb[0].mxu0
    %v649 = vpop.f32.mrb[0].mxu0
    %v650 = vpop.f32.mrb[0].mxu0
    %651 = vdwg.mxu0
    %v652 = vld [vmem:[%s5 + $0x6] sm:$0x1]
    %v653 = vld [vmem:[%s5 + $0x7] sm:$0x1]
    %v654 = vrot.slane %v647, 4
    %v655 = vadd.f32 %v647, %v654
    %v656 = vrot.slane %v655, 2
    %v657 = vadd.f32 %v655, %v656
    %v658 = vrot.slane %v657, 1
    %v659 = vadd.f32 %v657, %v658
    %v660 = vmul.f32 %v647, %v647
    %v661 = vrot.slane %v660, 4
    %v662 = vadd.f32 %v660, %v661
    %v663 = vrot.slane %v662, 2
    %v664 = vadd.f32 %v662, %v663
    %v665 = vrot.slane %v664, 1
    %v666 = vadd.f32 %v664, %v665
    %v667 = vmul.f32 %v659, 0.125
    %v668 = vmul.f32 %v666, 0.125
    %v669 = vmul.f32 %v667, %v667
    %v670 = vsub.f32 %v668, %v669
    %v671 = vadd.f32 %v670, 1e-05
    %v672 = vrsqrt.pop %v671
    %v673 = vmul.f32 %v652, %v672
    %v674 = vmul.f32 %v667, %v673
    %v675 = vsub.f32 %v653, %v674
    %v677 = vlaneseq
    %v678 = vshrl.u32 %v677, 7
    %v679 = vsub.s32 0, %v678
    %v680 = vrot.slane %v673, %v679
    %v682 = vmul.f32 %v647, %v680
    %v684 = vlaneseq
    %v685 = vshrl.u32 %v684, 7
    %v686 = vsub.s32 0, %v685
    %v687 = vrot.slane %v675, %v686
    %v689 = vadd.f32 %v682, %v687
    %v690 = vmax.f32 %v689, 0.0
    %v691 = vpack.c.bf16 %v690, %v690
    %v692 = vld [vmem:[#allocation10] sm:$0xf]
    %v693 = vld [vmem:[#allocation10 + $0x4] sm:$0xf]
    %v694 = vld [vmem:[#allocation10 + $0x8] sm:$0xf]
    %v695 = vld [vmem:[#allocation10 + $0xc] sm:$0xf]
    %v696 = vld [vmem:[#allocation10 + $0x10] sm:$0xf]
    %v697 = vld [vmem:[#allocation10 + $0x14] sm:$0xf]
    %v698 = vld [vmem:[#allocation10 + $0x18] sm:$0xf]
    %v699 = vld [vmem:[#allocation10 + $0x1c] sm:$0xf]
    %v700 = vld [vmem:[#allocation10 + $0x20] sm:$0xf]
    %v701 = vld [vmem:[#allocation10 + $0x24] sm:$0xf]
    %v702 = vld [vmem:[#allocation10 + $0x28] sm:$0xf]
    %v703 = vld [vmem:[#allocation10 + $0x2c] sm:$0xf]
    %v704 = vld [vmem:[#allocation10 + $0x30] sm:$0xf]
    %v705 = vld [vmem:[#allocation10 + $0x34] sm:$0xf]
    %v706 = vld [vmem:[#allocation10 + $0x38] sm:$0xf]
    %v707 = vld [vmem:[#allocation10 + $0x3c] sm:$0xf]
    %v708 = vld [vmem:[%s5 + $0x8] sm:$0x1]
    %v710 = vlaneseq
    %v711 = vshrl.u32 %v710, 7
    %v712 = vsub.s32 0, %v711
    %v713 = vrot.slane %v708, %v712
    %v731 = vunpack.c.l.b16 %v692
    %v732 = vunpack.c.l.b16 %v693
    %v733 = vunpack.c.l.b16 %v694
    %v734 = vunpack.c.l.b16 %v695
    %v735 = vunpack.c.l.b16 %v696
    %v736 = vunpack.c.l.b16 %v697
    %v737 = vunpack.c.l.b16 %v698
    %v738 = vunpack.c.l.b16 %v699
    %v739 = vunpack.c.l.b16 %v700
    %v740 = vunpack.c.l.b16 %v701
    %v741 = vunpack.c.l.b16 %v702
    %v742 = vunpack.c.l.b16 %v703
    %v743 = vunpack.c.l.b16 %v704
    %v744 = vunpack.c.l.b16 %v705
    %v745 = vunpack.c.l.b16 %v706
    %v746 = vunpack.c.l.b16 %v707
    %v747 = vpack.c.b16 %v732, %v731
    %v748 = vpack.c.b16 %v734, %v733
    %v749 = vpack.c.b16 %v736, %v735
    %v750 = vpack.c.b16 %v738, %v737
    %v751 = vpack.c.b16 %v740, %v739
    %v752 = vpack.c.b16 %v742, %v741
    %v753 = vpack.c.b16 %v744, %v743
    %v754 = vpack.c.b16 %v746, %v745
    %763 = vmatprep.subr.bf16.mxu0 0
    %764 = vmatpush1.bf16.msra.mxu0 %v747
    %765 = vmatprep.subr.bf16.mxu0 0
    %766 = vmatpush1.bf16.msra.mxu0 %v748
    %767 = vmatprep.subr.bf16.mxu0 0
    %768 = vmatpush1.bf16.msra.mxu0 %v749
    %769 = vmatprep.subr.bf16.mxu0 0
    %770 = vmatpush1.bf16.msra.mxu0 %v750
    %771 = vmatprep.subr.bf16.mxu0 0
    %772 = vmatpush1.bf16.msra.mxu0 %v751
    %773 = vmatprep.subr.bf16.mxu0 0
    %774 = vmatpush1.bf16.msra.mxu0 %v752
    %775 = vmatprep.subr.bf16.mxu0 0
    %776 = vmatpush1.bf16.msra.mxu0 %v753
    %777 = vmatprep.subr.bf16.mxu0 0
    %778 = vmatpush1.bf16.msra.mxu0 %v754
    %779 = vmatprep.subr.bf16.mxu0 0
    %780 = vmatpush1.bf16.msra.mxu0 0
    %781 = vmatprep.subr.bf16.mxu0 0
    %782 = vmatpush1.bf16.msra.mxu0 0
    %783 = vmatprep.subr.bf16.mxu0 0
    %784 = vmatpush1.bf16.msra.mxu0 0
    %785 = vmatprep.subr.bf16.mxu0 0
    %786 = vmatpush1.bf16.msra.mxu0 0
    %787 = vmatprep.subr.bf16.mxu0 0
    %788 = vmatpush1.bf16.msra.mxu0 0
    %789 = vmatprep.subr.bf16.mxu0 0
    %790 = vmatpush1.bf16.msra.mxu0 0
    %791 = vmatprep.subr.bf16.mxu0 0
    %792 = vmatpush1.bf16.msra.mxu0 0
    %793 = vmatprep.subr.bf16.mxu0 0
    %794 = vmatpush1.bf16.msra.mxu0 0
    %795 = vmatprep.mubr.bf16.mxu0 0
    %796 = vmatmul.mubr.bf16.gmra.mrb[0].mxu0 %v691
    %v797 = vpop.f32.mrb[0].mxu0
    %v798 = vadd.f32 %v713, %v797
    %v799 = vpop.f32.mrb[0].mxu0
    %v800 = vpop.f32.mrb[0].mxu0
    %v801 = vpop.f32.mrb[0].mxu0
    %802 = vdwg.mxu0
    %v803 = vsub.f32 0.0, %v798
    %v804 = vmul.f32 %v803, 1.442695
    %v805 = vpow.pop %v804
    %v806 = vadd.f32 %v805, 1.0
    %v807 = vrcp.pop %v806
    %808 = vst [vmem:[#allocation11] sm:$0xff] %v807
    // Predicated region
    $region46: #{tpu_custom_call.1} parent=1 // pred_check
      _
    $region47: #{tpu_custom_call.1} parent=1 // pred_check_branch
      %810 = sbr.rel (0) target = $region49
    $region48: #{tpu_custom_call.1} parent=1 // pred_region
      %s812 = ssub.s32 128, 128
      %813 = vsyncadd [#allocation4], %s812
      %s815 = sshll.u32 [#allocation11], 4
      %s816 = int_to_ptr.vmem [resolvable:$true] %s815
      %818 = dma.vmem_to_hbm [thread:$0]  %s816, 128, %s6, [#allocation4]
    $region49: #{tpu_custom_call.1} parent=1 // pred_fallthru
      _
    // Predicated region
    $region50: #{tpu_custom_call.1} parent=1 // pred_check
      _
    $region51: #{tpu_custom_call.1} parent=1 // pred_check_branch
      %820 = sbr.rel (0) target = $region53
    $region52: #{tpu_custom_call.1} parent=1 // pred_region
      %821 = dma.done [#allocation4], 128
    $region53: #{tpu_custom_call.1} parent=1 // pred_fallthru
      _
    %822 = vsyncpa [#allocation3], 1
    %823 = vsyncpa [#allocation6], 1
    %824 = vsyncpa [#allocation9], 1
    %825 = vsyncpa [#allocation4], 1

</llo_original>
